<compile_context>
chip_gen: v6e
topology: v6e:2x2x1
jax: 0.10.0
libtpu: 0.0.40
codegen_flags: <defaults>
</compile_context>

<pallas_src>
import numpy as np
import jax
import jax.numpy as jnp
from jax.experimental import pallas as pl
from jax.experimental.pallas import tpu as pltpu

# Problem sizes implied by the module (digits dataset: 8x8 image -> 64 pixels,
# n_time is hard-coded to 150 in the original script).
H = W_IMG = 8
N_PIXELS = H * W_IMG          # 64
N_TIME = 150
N_BINS = 10
CHUNK = N_TIME // N_BINS      # 15
INPUT_FREQ = 5.0

N_TIME_PAD = 256              # lane-dense padded time axis (zeros beyond 150)
N_OUT_PAD = 128               # lane-dense padded output columns (zeros beyond 10)


def _time_domain_waveform():
    t = np.linspace(-3.0, 3.0, N_TIME)
    return np.exp(1j * INPUT_FREQ * t) * np.exp(-500.0 * INPUT_FREQ ** 2 * t ** 2)


def _round_up(n, m):
    return (n + m - 1) // m * m


# ----------------------------- Pallas kernel --------------------------------
def _scattering_kernel(x_ref, m_ref, bfold_ref, bias_ref, out_ref):
    # real = x @ M_fold   (bf16 x bf16 -> f32 accumulate), shape (BM, 256)
    real = jnp.dot(x_ref[...], m_ref[...], preferred_element_type=jnp.float32)
    # torch.chunk + sum(sqrt(x^2+1e-20)) + nn.Linear  ==  |real| @ B_fold + b
    absr = jnp.abs(real).astype(jnp.bfloat16)
    out_ref[...] = (jnp.dot(absr, bfold_ref[...],
                            preferred_element_type=jnp.float32)
                    + bias_ref[...])


# ---------------------------- host-side folding ------------------------------
def fold_parameters(v, phase, scatter_c, correction, lin_w, lin_b):
    """Fold every sample-invariant op into two matrices + a bias (float64 math).

    Returns (M_fold_bf16 (64,256), B_fold_bf16 (256,128), bias_f32 (1,128)).
    Call once per parameter set and reuse across forward calls.
    """
    wf = _time_domain_waveform()                              # (n_time,) complex128
    wfF = np.fft.fft(wf)
    idx = np.arange(N_TIME)
    g = np.exp(2j * np.pi * np.outer(idx, idx) / N_TIME) / N_TIME   # inverse DFT
    w = np.asarray(scatter_c).astype(np.complex128)           # (n_time, n_pixels)
    corr = np.asarray(correction).astype(np.float64)          # (n_time,)

    # m[k, j] = sum_i W[i,k] * fft(wf)[i] * exp(+2*pi*j*i*j/n) / (n*corr[j])
    m = (w.T * wfF[None, :]) @ g                               # (n_pixels, n_time)
    m = m / corr[None, :]

    # Fold the complex per-pixel amplitude (x is real -> only the real part of
    # diag(c) @ m survives):  real = x @ M_fold.
    c = np.asarray(v).astype(np.float64) * np.exp(
        1j * np.asarray(phase).astype(np.float64))             # (n_pixels,)
    m_fold = np.real(c[:, None] * m)                           # (64, 150)
    m_pad = np.zeros((N_PIXELS, N_TIME_PAD), np.float64)
    m_pad[:, :N_TIME] = m_fold

    # Fold binning mask and nn.Linear weight:  out = |real| @ B_fold + b.
    bmask = ((np.arange(N_TIME)[:, None] // CHUNK)
             == np.arange(N_BINS)[None, :]).astype(np.float64)  # (150, 10)
    b_fold = bmask @ np.asarray(lin_w).astype(np.float64).T     # (150, 10)
    b_pad = np.zeros((N_TIME_PAD, N_OUT_PAD), np.float64)
    b_pad[:N_TIME, :N_BINS] = b_fold

    bias_pad = np.zeros((1, N_OUT_PAD), np.float64)
    bias_pad[0, :N_BINS] = np.asarray(lin_b).astype(np.float64)

    return (jnp.asarray(m_pad, jnp.bfloat16),
            jnp.asarray(b_pad, jnp.bfloat16),
            jnp.asarray(bias_pad, jnp.float32))


# ------------------------------- wrapper -------------------------------------
def scattering_forward_folded(x_batch, folded):
    """Forward pass given pre-folded constants (preferred entry point)."""
    m_bf, bfold_bf, bias_f32 = folded
    x_flat = jnp.asarray(x_batch, jnp.float32).reshape(-1, N_PIXELS)
    B = x_flat.shape[0]

    # Batch tiling: up to 2048 samples per grid step (multiple of 8).  If the
    # whole batch would be a single step, split into two so both v7x cores work.
    BM = min(2048, _round_up(B, 8))
    if BM >= 16 and _round_up(B, BM) // BM == 1:
        BM = _round_up((BM + 1) // 2, 8)
    B_pad = _round_up(B, BM)

    x_pad = jnp.zeros((B_pad, N_PIXELS), jnp.float32).at[:B].set(x_flat)
    x_pad = x_pad.astype(jnp.bfloat16)

    rep = lambda shape: pl.BlockSpec(shape, lambda b: (0, 0))
    grid_spec = pltpu.PrefetchScalarGridSpec(
        num_scalar_prefetch=0,
        grid=(B_pad // BM,),
        in_specs=[
            pl.BlockSpec((BM, N_PIXELS), lambda b: (b, 0)),   # x batch tile
            rep((N_PIXELS, N_TIME_PAD)),                      # folded M (bf16)
            rep((N_TIME_PAD, N_OUT_PAD)),                     # folded bin+linear
            rep((1, N_OUT_PAD)),                              # padded bias
        ],
        out_specs=pl.BlockSpec((BM, N_OUT_PAD), lambda b: (b, 0)),
    )

    out = pl.pallas_call(
        _scattering_kernel,
        out_shape=jax.ShapeDtypeStruct((B_pad, N_OUT_PAD), jnp.float32),
        grid_spec=grid_spec,
        compiler_params=pltpu.CompilerParams(
            dimension_semantics=("parallel",)),
    )(x_pad, m_bf, bfold_bf, bias_f32)
    return out[:B, :N_BINS]


def scattering_forward(x_batch, v, phase, scatter_c, correction, lin_w, lin_b):
    """Convenience one-shot wrapper (folds constants every call)."""
    folded = fold_parameters(v, phase, scatter_c, correction, lin_w, lin_b)
    return scattering_forward_folded(x_batch, folded)


# --------------------------- pure-JAX reference -------------------------------
def reference_forward(x_batch, v, phase, scatter_c, correction, lin_w, lin_b):
    """Pure-JAX reference mirroring the PyTorch code (complex FFT path)."""
    B = x_batch.shape[0]
    wf = jnp.asarray(_time_domain_waveform(), jnp.complex64)
    a = (x_batch * v * jnp.exp(1j * phase)).astype(jnp.complex64)   # (B, n_pixels)
    e = a[:, :, None] * wf[None, None, :]                           # E_scaled
    ef = jnp.fft.fft(e, axis=2)
    s = jnp.einsum('ik,bki->bi', scatter_c, ef)
    real = jnp.fft.ifft(s, axis=1).real / correction[None, :]
    bins = jnp.sqrt(real ** 2 + 1e-20).reshape(B, N_BINS, CHUNK).sum(axis=2)
    return bins @ lin_w.T + lin_b[None, :]


if __name__ == "__main__":
    key = jax.random.PRNGKey(0)
    kx, kv, kp, ksr, ksi, kc, kw, kb = jax.random.split(key, 8)

    B = 2
    # x_batch plays the role of flattened 8x8 digit images (values in [0, 16]).
    x_batch = jax.random.uniform(kx, (B, N_PIXELS), jnp.float32) * 16.0

    # Parameters implied by __init__ (deterministic synthetic init).
    v = jax.random.uniform(kv, (N_PIXELS,), jnp.float32)
    phase = jax.random.uniform(kp, (N_PIXELS,), jnp.float32) * (2.0 * np.pi)
    scatter = ((jax.random.normal(ksr, (N_TIME, N_PIXELS), jnp.float32)
                + 1j * jax.random.normal(ksi, (N_TIME, N_PIXELS), jnp.float32))
               / np.sqrt(N_PIXELS)).astype(jnp.complex64)
    # TODO(synk): the original module estimates `correction` with a 10000-trial
    # random Monte-Carlo in __init__; replaced with a deterministic positive surrogate.
    correction = jax.random.uniform(kc, (N_TIME,), jnp.float32, 0.5, 1.5)
    bound = 1.0 / np.sqrt(10.0)
    lin_w = jax.random.uniform(kw, (10, 10), jnp.float32, -bound, bound)
    lin_b = jax.random.uniform(kb, (10,), jnp.float32, -bound, bound)

    # Fold once (hoisted out of the per-call path), then run the kernel.
    folded = fold_parameters(v, phase, scatter, correction, lin_w, lin_b)
    out = scattering_forward_folded(x_batch, folded)
    out = jax.block_until_ready(out)

    ref = reference_forward(x_batch, v, phase, scatter, correction, lin_w, lin_b)
    ref = jax.block_until_ready(ref)

    assert out.shape == (B, N_BINS)
    np.testing.assert_allclose(np.asarray(out), np.asarray(ref),
                               rtol=5e-2, atol=5e-3)
    print("KERNEL_OK")
</pallas_src>

<mosaic_0001>
module attributes {stable_mosaic.version = 11 : i64} {
  func.func @_scattering_kernel(%arg0: i32, %arg1: memref<8x64xbf16, #tpu.memory_space<vmem>>, %arg2: memref<64x256xbf16, #tpu.memory_space<vmem>>, %arg3: memref<256x128xbf16, #tpu.memory_space<vmem>>, %arg4: memref<1x128xf32, #tpu.memory_space<vmem>>, %arg5: memref<8x128xf32, #tpu.memory_space<vmem>>) attributes {dimension_semantics = [#tpu.dimension_semantics<parallel>], iteration_bounds = array<i64: 1>, scalar_prefetch = 0 : i64, scratch_operands = 0 : i64, tpu.core_type = #tpu.core_type<tc>, window_params = [{transform_indices = @transform_0, window_bounds = array<i64: 8, 64>}, {pipeline_mode = #tpu.pipeline_mode<synchronous>, transform_indices = @transform_1, window_bounds = array<i64: 64, 256>}, {pipeline_mode = #tpu.pipeline_mode<synchronous>, transform_indices = @transform_2, window_bounds = array<i64: 256, 128>}, {pipeline_mode = #tpu.pipeline_mode<synchronous>, transform_indices = @transform_3, window_bounds = array<i64: 1, 128>}, {transform_indices = @transform_4, window_bounds = array<i64: 8, 128>}]} {
    %c0 = arith.constant 0 : index
    %c0_0 = arith.constant 0 : index
    %0 = vector.load %arg1[%c0, %c0_0] : memref<8x64xbf16, #tpu.memory_space<vmem>>, vector<8x64xbf16>
    %c0_1 = arith.constant 0 : index
    %c0_2 = arith.constant 0 : index
    %1 = vector.load %arg2[%c0_1, %c0_2] : memref<64x256xbf16, #tpu.memory_space<vmem>>, vector<64x256xbf16>
    %cst = arith.constant dense<0.000000e+00> : vector<8x256xf32>
    %2 = tpu.matmul %0, %1, %cst {dimension_numbers = #tpu.dot_dimension_numbers<[1], [0], [0], [1], [0, 0, 1, 1], [], []>} : vector<8x64xbf16>, vector<64x256xbf16>, vector<8x256xf32> -> vector<8x256xf32>
    %3 = math.absf %2 : vector<8x256xf32>
    %4 = arith.truncf %3 : vector<8x256xf32> to vector<8x256xbf16>
    %c0_3 = arith.constant 0 : index
    %c0_4 = arith.constant 0 : index
    %5 = vector.load %arg3[%c0_3, %c0_4] : memref<256x128xbf16, #tpu.memory_space<vmem>>, vector<256x128xbf16>
    %cst_5 = arith.constant dense<0.000000e+00> : vector<8x128xf32>
    %6 = tpu.matmul %4, %5, %cst_5 {dimension_numbers = #tpu.dot_dimension_numbers<[1], [0], [0], [1], [0, 0, 1, 1], [], []>} : vector<8x256xbf16>, vector<256x128xbf16>, vector<8x128xf32> -> vector<8x128xf32>
    %c0_6 = arith.constant 0 : index
    %c0_7 = arith.constant 0 : index
    %7 = vector.load %arg4[%c0_6, %c0_7] : memref<1x128xf32, #tpu.memory_space<vmem>>, vector<1x128xf32>
    %8 = vector.broadcast %7 : vector<1x128xf32> to vector<8x128xf32>
    %9 = arith.addf %6, %8 : vector<8x128xf32>
    %c0_8 = arith.constant 0 : index
    %c0_9 = arith.constant 0 : index
    %10 = vector.load %arg5[%c0_8, %c0_9] : memref<8x128xf32, #tpu.memory_space<vmem>>, vector<8x128xf32>
    tpu.vector_store %arg5[%c0_8, %c0_9], %9 {strides = array<i32>} : memref<8x128xf32, #tpu.memory_space<vmem>>, vector<8x128xf32>,
    return
  }
  func.func @transform_0(%arg0: i32) -> (i32, i32) {
    %c0_i32 = arith.constant 0 : i32
    %c0_i32_0 = arith.constant 0 : i32
    return %arg0, %c0_i32 : i32, i32
  }
  func.func @transform_1(%arg0: i32) -> (i32, i32) {
    %c0_i32 = arith.constant 0 : i32
    %c0_i32_0 = arith.constant 0 : i32
    %c0_i32_1 = arith.constant 0 : i32
    return %c0_i32, %c0_i32_0 : i32, i32
  }
  func.func @transform_2(%arg0: i32) -> (i32, i32) {
    %c0_i32 = arith.constant 0 : i32
    %c0_i32_0 = arith.constant 0 : i32
    %c0_i32_1 = arith.constant 0 : i32
    return %c0_i32, %c0_i32_0 : i32, i32
  }
  func.func @transform_3(%arg0: i32) -> (i32, i32) {
    %c0_i32 = arith.constant 0 : i32
    %c0_i32_0 = arith.constant 0 : i32
    %c0_i32_1 = arith.constant 0 : i32
    return %c0_i32, %c0_i32_0 : i32, i32
  }
  func.func @transform_4(%arg0: i32) -> (i32, i32) {
    %c0_i32 = arith.constant 0 : i32
    %c0_i32_0 = arith.constant 0 : i32
    return %arg0, %c0_i32 : i32, i32
  }
}

</mosaic_0001>

<llo_original>
// kernel: tpu_custom_call.1
$region0: #{tpu_custom_call.1}
  #allocation0 [shape = 'u32[]', space=smem, size = 0x4, offset = 0x4, fixed_abs, tag = 'smem constant byte address 0x4 - core index']
  #allocation1 [shape = 'u32[144,128]{1,0:T(1,128)}', space=vmem, size = 0x12000, scoped, tag = 'internal scratch']
  %s0 = inlined_call_operand.hbm [shape: bf16[8,64], index: 0, kind: input, shape index: {}]
  %s1 = inlined_call_operand.hbm [shape: bf16[64,256], index: 1, kind: input, shape index: {}]
  %s2 = inlined_call_operand.hbm [shape: bf16[256,128], index: 2, kind: input, shape index: {}]
  %s3 = inlined_call_operand.vmem [shape: f32[1,128], index: 3, kind: input, shape index: {}]
  %s4 = inlined_call_operand.hbm [shape: f32[8,128], index: 4, kind: output, shape index: {}]
  %s5 = sld [smem:[#allocation0]]
  $region38: #{tpu_custom_call.1} parent=0
    _
  %s7 = ssub.s32 1, %s5
  %s8 = scalar_select 0, %s7, %s5
  $region1: #{tpu_custom_call.1} parent=0
    #allocation2 [shape = 'u8[2048]{0}', space=vmem, size = 0x800, scoped, tag = 'input window, operand 0, single buffered']
    #allocation3 [shape = 's32[1]{0}', space=sflag, size = 0x4, scoped, tag = 'scoped memory for tpu_custom_call.1']
    #allocation4 [shape = 's32[1]{0}', space=sflag, size = 0x4, scoped, tag = 'scoped memory for tpu_custom_call.1']
    #allocation5 [shape = 'u8[32768]{0}', space=vmem, size = 0x8000, scoped, tag = 'input window, operand 1, single buffered']
    #allocation6 [shape = 's32[1]{0}', space=sflag, size = 0x4, scoped, tag = 'scoped memory for tpu_custom_call.1']
    #allocation7 [shape = 'u8[65536]{0}', space=vmem, size = 0x10000, scoped, tag = 'input window, operand 2, single buffered']
    #allocation8 [shape = 'u8[4096]{0}', space=vmem, size = 0x1000, scoped, tag = 'output window, operand 0, single buffered']
    %9 = vsyncpa [#allocation3], 0
    %10 = vsyncpa [#allocation6], 0
    %11 = vsyncpa [#allocation4], 0
    // Predicated region
    $region2: #{tpu_custom_call.1} parent=1 // pred_check
      _
    $region3: #{tpu_custom_call.1} parent=1 // pred_check_branch
      %13 = sbr.rel (0) target = $region5
    $region4: #{tpu_custom_call.1} parent=1 // pred_region
      %s15 = ssub.s32 64, 64
      %16 = vsyncadd [#allocation3], %s15
      %s18 = sshll.u32 [#allocation2], 4
      %s19 = int_to_ptr.vmem [resolvable:$true] %s18
      %21 = dma.hbm_to_vmem [thread:$0]  %s0, 64, %s19, [#allocation3]
    $region5: #{tpu_custom_call.1} parent=1 // pred_fallthru
      _
    // Predicated region
    $region6: #{tpu_custom_call.1} parent=1 // pred_check
      _
    $region7: #{tpu_custom_call.1} parent=1 // pred_check_branch
      %23 = sbr.rel (0) target = $region9
    $region8: #{tpu_custom_call.1} parent=1 // pred_region
      %s25 = ssub.s32 1024, 1024
      %26 = vsyncadd [#allocation6], %s25
      %s27 = sshll.u32 [#allocation5], 4
      %s28 = int_to_ptr.vmem [resolvable:$true] %s27
      %33 = dma.hbm_to_vmem [thread:$0]  %s1, 1024, %s28, [#allocation6], 128, 128, 8
    $region9: #{tpu_custom_call.1} parent=1 // pred_fallthru
      _
    // Predicated region
    $region10: #{tpu_custom_call.1} parent=1 // pred_check
      _
    $region11: #{tpu_custom_call.1} parent=1 // pred_check_branch
      %35 = sbr.rel (0) target = $region13
    $region12: #{tpu_custom_call.1} parent=1 // pred_region
      %s37 = ssub.s32 2048, 2048
      %38 = vsyncadd [#allocation6], %s37
      %s39 = sshll.u32 [#allocation7], 4
      %s40 = int_to_ptr.vmem [resolvable:$true] %s39
      %45 = dma.hbm_to_vmem [thread:$0]  %s2, 2048, %s40, [#allocation6], 64, 64, 4
    $region13: #{tpu_custom_call.1} parent=1 // pred_fallthru
      _
    // Predicated region
    $region14: #{tpu_custom_call.1} parent=1 // pred_check
      _
    $region15: #{tpu_custom_call.1} parent=1 // pred_check_branch
      %47 = sbr.rel (0) target = $region17
    $region16: #{tpu_custom_call.1} parent=1 // pred_region
      _
    $region17: #{tpu_custom_call.1} parent=1 // pred_fallthru
      _
    // Predicated region
    $region18: #{tpu_custom_call.1} parent=1 // pred_check
      _
    $region19: #{tpu_custom_call.1} parent=1 // pred_check_branch
      %49 = sbr.rel (0) target = $region21
    $region20: #{tpu_custom_call.1} parent=1 // pred_region
      %50 = dma.done [#allocation3], 64
    $region21: #{tpu_custom_call.1} parent=1 // pred_fallthru
      _
    // Predicated region
    $region22: #{tpu_custom_call.1} parent=1 // pred_check
      _
    $region23: #{tpu_custom_call.1} parent=1 // pred_check_branch
      %52 = sbr.rel (0) target = $region25
    $region24: #{tpu_custom_call.1} parent=1 // pred_region
      %53 = dma.done [#allocation6], 1024
    $region25: #{tpu_custom_call.1} parent=1 // pred_fallthru
      _
    // Predicated region
    $region26: #{tpu_custom_call.1} parent=1 // pred_check
      _
    $region27: #{tpu_custom_call.1} parent=1 // pred_check_branch
      %55 = sbr.rel (0) target = $region29
    $region28: #{tpu_custom_call.1} parent=1 // pred_region
      %56 = dma.done [#allocation6], 2048
    $region29: #{tpu_custom_call.1} parent=1 // pred_fallthru
      _
    %v58 = vld [vmem:[#allocation2] sm:$0xf]
    %v59 = vld [vmem:[#allocation5] sm:$0xff]
    %v60 = vld [vmem:[#allocation5 + $0x8] sm:$0xff]
    %v61 = vld [vmem:[#allocation5 + $0x10] sm:$0xff]
    %v62 = vld [vmem:[#allocation5 + $0x18] sm:$0xff]
    %v63 = vld [vmem:[#allocation5 + $0x20] sm:$0xff]
    %v64 = vld [vmem:[#allocation5 + $0x28] sm:$0xff]
    %v65 = vld [vmem:[#allocation5 + $0x30] sm:$0xff]
    %v66 = vld [vmem:[#allocation5 + $0x38] sm:$0xff]
    %v75 = vunpack.c.l.b16 %v59
    %v76 = vunpack.c.h.b16 %v59
    %v77 = vunpack.c.l.b16 %v60
    %v78 = vunpack.c.h.b16 %v60
    %v79 = vunpack.c.l.b16 %v61
    %v80 = vunpack.c.h.b16 %v61
    %v81 = vunpack.c.l.b16 %v62
    %v82 = vunpack.c.h.b16 %v62
    %v83 = vunpack.c.l.b16 %v63
    %v84 = vunpack.c.h.b16 %v63
    %v85 = vunpack.c.l.b16 %v64
    %v86 = vunpack.c.h.b16 %v64
    %v87 = vunpack.c.l.b16 %v65
    %v88 = vunpack.c.h.b16 %v65
    %v89 = vunpack.c.l.b16 %v66
    %v90 = vunpack.c.h.b16 %v66
    %v91 = vpack.c.b16 %v77, %v75
    %v92 = vpack.c.b16 %v78, %v76
    %v93 = vpack.c.b16 %v81, %v79
    %v94 = vpack.c.b16 %v82, %v80
    %v95 = vpack.c.b16 %v85, %v83
    %v96 = vpack.c.b16 %v86, %v84
    %v97 = vpack.c.b16 %v89, %v87
    %v98 = vpack.c.b16 %v90, %v88
    %vm107 = vcmask 523264
    %v109 = vsel %vm107, %v58, 0
    %111 = vmatprep.subr.bf16.mxu0 0
    %112 = vmatpush1.bf16.msra.mxu0 0
    %113 = vmatprep.subr.bf16.mxu0 0
    %114 = vmatpush1.bf16.msra.mxu0 0
    %115 = vmatprep.subr.bf16.mxu0 0
    %116 = vmatpush1.bf16.msra.mxu0 0
    %117 = vmatprep.subr.bf16.mxu0 0
    %118 = vmatpush1.bf16.msra.mxu0 0
    %119 = vmatprep.subr.bf16.mxu0 %v98
    %120 = vmatpush1.bf16.msra.mxu0 %v97
    %121 = vmatprep.subr.bf16.mxu0 %v96
    %122 = vmatpush1.bf16.msra.mxu0 %v95
    %123 = vmatprep.subr.bf16.mxu0 %v94
    %124 = vmatpush1.bf16.msra.mxu0 %v93
    %125 = vmatprep.subr.bf16.mxu0 %v92
    %126 = vmatpush1.bf16.msra.mxu0 %v91
    %127 = vmatprep.subr.bf16.mxu0 0
    %128 = vmatpush2.bf16.msra.mxu0 0
    %129 = vmatprep.subr.bf16.mxu0 0
    %130 = vmatpush2.bf16.msra.mxu0 0
    %131 = vmatprep.subr.bf16.mxu0 0
    %132 = vmatpush2.bf16.msra.mxu0 0
    %133 = vmatprep.subr.bf16.mxu0 0
    %134 = vmatpush2.bf16.msra.mxu0 0
    %135 = vmatprep.subr.bf16.mxu0 0
    %136 = vmatpush2.bf16.msra.mxu0 0
    %137 = vmatprep.subr.bf16.mxu0 0
    %138 = vmatpush2.bf16.msra.mxu0 0
    %139 = vmatprep.subr.bf16.mxu0 0
    %140 = vmatpush2.bf16.msra.mxu0 0
    %141 = vmatprep.subr.bf16.mxu0 0
    %142 = vmatpush2.bf16.msra.mxu0 0
    %143 = vmatprep.mubr.bf16.mxu0 0
    %144 = vmatmul.mubr.bf16.gmra.mxu0 %v109
    %v145 = vpop.f32.mrf.mxu0
    %v146 = vadd.f32 0.0, %v145
    %v147 = vpop.f32.mrf.mxu0
    %v148 = vadd.f32 0.0, %v147
    %v149 = vpop.f32.mrf.mxu0
    %v150 = vpop.f32.mrf.mxu0
    %151 = vdwg.mxu0
    %v152 = vand.u32 2147483647, %v146
    %v153 = vand.u32 2147483647, %v148
    %v154 = vpack.c.bf16 %v152, %v152
    %v155 = vpack.c.bf16 %v153, %v153
    %v156 = vld [vmem:[#allocation7] sm:$0xf]
    %v157 = vld [vmem:[#allocation7 + $0x4] sm:$0xf]
    %v158 = vld [vmem:[#allocation7 + $0x8] sm:$0xf]
    %v159 = vld [vmem:[#allocation7 + $0xc] sm:$0xf]
    %v160 = vld [vmem:[#allocation7 + $0x10] sm:$0xf]
    %v161 = vld [vmem:[#allocation7 + $0x14] sm:$0xf]
    %v162 = vld [vmem:[#allocation7 + $0x18] sm:$0xf]
    %v163 = vld [vmem:[#allocation7 + $0x1c] sm:$0xf]
    %v164 = vld [vmem:[#allocation7 + $0x20] sm:$0xf]
    %v165 = vld [vmem:[#allocation7 + $0x24] sm:$0xf]
    %v166 = vld [vmem:[#allocation7 + $0x28] sm:$0xf]
    %v167 = vld [vmem:[#allocation7 + $0x2c] sm:$0xf]
    %v168 = vld [vmem:[#allocation7 + $0x30] sm:$0xf]
    %v169 = vld [vmem:[#allocation7 + $0x34] sm:$0xf]
    %v170 = vld [vmem:[#allocation7 + $0x38] sm:$0xf]
    %v171 = vld [vmem:[#allocation7 + $0x3c] sm:$0xf]
    %v172 = vld [vmem:[#allocation7 + $0x40] sm:$0xf]
    %v173 = vld [vmem:[#allocation7 + $0x44] sm:$0xf]
    %v174 = vld [vmem:[#allocation7 + $0x48] sm:$0xf]
    %v175 = vld [vmem:[#allocation7 + $0x4c] sm:$0xf]
    %v176 = vld [vmem:[#allocation7 + $0x50] sm:$0xf]
    %v177 = vld [vmem:[#allocation7 + $0x54] sm:$0xf]
    %v178 = vld [vmem:[#allocation7 + $0x58] sm:$0xf]
    %v179 = vld [vmem:[#allocation7 + $0x5c] sm:$0xf]
    %v180 = vld [vmem:[#allocation7 + $0x60] sm:$0xf]
    %v181 = vld [vmem:[#allocation7 + $0x64] sm:$0xf]
    %v182 = vld [vmem:[#allocation7 + $0x68] sm:$0xf]
    %v183 = vld [vmem:[#allocation7 + $0x6c] sm:$0xf]
    %v184 = vld [vmem:[#allocation7 + $0x70] sm:$0xf]
    %v185 = vld [vmem:[#allocation7 + $0x74] sm:$0xf]
    %v186 = vld [vmem:[#allocation7 + $0x78] sm:$0xf]
    %v187 = vld [vmem:[#allocation7 + $0x7c] sm:$0xf]
    %v188 = vld [vmem:[%s3] sm:$0x1]
    %v190 = vlaneseq
    %v191 = vshrl.u32 %v190, 7
    %v192 = vsub.s32 0, %v191
    %v193 = vrot.slane %v188, %v192
    %v227 = vunpack.c.l.b16 %v156
    %v228 = vunpack.c.l.b16 %v157
    %v229 = vunpack.c.l.b16 %v158
    %v230 = vunpack.c.l.b16 %v159
    %v231 = vunpack.c.l.b16 %v160
    %v232 = vunpack.c.l.b16 %v161
    %v233 = vunpack.c.l.b16 %v162
    %v234 = vunpack.c.l.b16 %v163
    %v235 = vunpack.c.l.b16 %v164
    %v236 = vunpack.c.l.b16 %v165
    %v237 = vunpack.c.l.b16 %v166
    %v238 = vunpack.c.l.b16 %v167
    %v239 = vunpack.c.l.b16 %v168
    %v240 = vunpack.c.l.b16 %v169
    %v241 = vunpack.c.l.b16 %v170
    %v242 = vunpack.c.l.b16 %v171
    %v243 = vunpack.c.l.b16 %v172
    %v244 = vunpack.c.l.b16 %v173
    %v245 = vunpack.c.l.b16 %v174
    %v246 = vunpack.c.l.b16 %v175
    %v247 = vunpack.c.l.b16 %v176
    %v248 = vunpack.c.l.b16 %v177
    %v249 = vunpack.c.l.b16 %v178
    %v250 = vunpack.c.l.b16 %v179
    %v251 = vunpack.c.l.b16 %v180
    %v252 = vunpack.c.l.b16 %v181
    %v253 = vunpack.c.l.b16 %v182
    %v254 = vunpack.c.l.b16 %v183
    %v255 = vunpack.c.l.b16 %v184
    %v256 = vunpack.c.l.b16 %v185
    %v257 = vunpack.c.l.b16 %v186
    %v258 = vunpack.c.l.b16 %v187
    %v259 = vpack.c.b16 %v228, %v227
    %v260 = vpack.c.b16 %v230, %v229
    %v261 = vpack.c.b16 %v232, %v231
    %v262 = vpack.c.b16 %v234, %v233
    %v263 = vpack.c.b16 %v236, %v235
    %v264 = vpack.c.b16 %v238, %v237
    %v265 = vpack.c.b16 %v240, %v239
    %v266 = vpack.c.b16 %v242, %v241
    %v267 = vpack.c.b16 %v244, %v243
    %v268 = vpack.c.b16 %v246, %v245
    %v269 = vpack.c.b16 %v248, %v247
    %v270 = vpack.c.b16 %v250, %v249
    %v271 = vpack.c.b16 %v252, %v251
    %v272 = vpack.c.b16 %v254, %v253
    %v273 = vpack.c.b16 %v256, %v255
    %v274 = vpack.c.b16 %v258, %v257
    %291 = vmatprep.subr.bf16.mxu0 0
    %292 = vmatpush1.bf16.msra.mxu0 %v266
    %293 = vmatprep.subr.bf16.mxu0 0
    %294 = vmatpush1.bf16.msra.mxu0 %v265
    %295 = vmatprep.subr.bf16.mxu0 0
    %296 = vmatpush1.bf16.msra.mxu0 %v264
    %297 = vmatprep.subr.bf16.mxu0 0
    %298 = vmatpush1.bf16.msra.mxu0 %v263
    %299 = vmatprep.subr.bf16.mxu0 0
    %300 = vmatpush1.bf16.msra.mxu0 %v262
    %301 = vmatprep.subr.bf16.mxu0 0
    %302 = vmatpush1.bf16.msra.mxu0 %v261
    %303 = vmatprep.subr.bf16.mxu0 0
    %304 = vmatpush1.bf16.msra.mxu0 %v260
    %305 = vmatprep.subr.bf16.mxu0 0
    %306 = vmatpush1.bf16.msra.mxu0 %v259
    %307 = vmatprep.subr.bf16.mxu0 0
    %308 = vmatpush2.bf16.msra.mxu0 %v274
    %309 = vmatprep.subr.bf16.mxu0 0
    %310 = vmatpush2.bf16.msra.mxu0 %v273
    %311 = vmatprep.subr.bf16.mxu0 0
    %312 = vmatpush2.bf16.msra.mxu0 %v272
    %313 = vmatprep.subr.bf16.mxu0 0
    %314 = vmatpush2.bf16.msra.mxu0 %v271
    %315 = vmatprep.subr.bf16.mxu0 0
    %316 = vmatpush2.bf16.msra.mxu0 %v270
    %317 = vmatprep.subr.bf16.mxu0 0
    %318 = vmatpush2.bf16.msra.mxu0 %v269
    %319 = vmatprep.subr.bf16.mxu0 0
    %320 = vmatpush2.bf16.msra.mxu0 %v268
    %321 = vmatprep.subr.bf16.mxu0 0
    %322 = vmatpush2.bf16.msra.mxu0 %v267
    %323 = vmatprep.mubr.bf16.mxu0 %v155
    %324 = vmatmul.mubr.bf16.gmra.mxu0 %v154
    %v325 = vpop.f32.mrf.mxu0
    %v326 = vadd.f32 %v193, %v325
    %v327 = vpop.f32.mrf.mxu0
    %v328 = vpop.f32.mrf.mxu0
    %v329 = vpop.f32.mrf.mxu0
    %330 = vdwg.mxu0
    %331 = vst [vmem:[#allocation8] sm:$0xff] %v326
    // Predicated region
    $region30: #{tpu_custom_call.1} parent=1 // pred_check
      _
    $region31: #{tpu_custom_call.1} parent=1 // pred_check_branch
      %333 = sbr.rel (0) target = $region33
    $region32: #{tpu_custom_call.1} parent=1 // pred_region
      %s335 = ssub.s32 128, 128
      %336 = vsyncadd [#allocation4], %s335
      %s338 = sshll.u32 [#allocation8], 4
      %s339 = int_to_ptr.vmem [resolvable:$true] %s338
      %341 = dma.vmem_to_hbm [thread:$0]  %s339, 128, %s4, [#allocation4]
    $region33: #{tpu_custom_call.1} parent=1 // pred_fallthru
      _
    // Predicated region
    $region34: #{tpu_custom_call.1} parent=1 // pred_check
      _
    $region35: #{tpu_custom_call.1} parent=1 // pred_check_branch
      %343 = sbr.rel (0) target = $region37
    $region36: #{tpu_custom_call.1} parent=1 // pred_region
      %344 = dma.done [#allocation4], 128
    $region37: #{tpu_custom_call.1} parent=1 // pred_fallthru
      _
    %345 = vsyncpa [#allocation3], 1
    %346 = vsyncpa [#allocation6], 1
    %347 = vsyncpa [#allocation4], 1

</llo_original>
